<compile_context>
chip_gen: v7x
topology: tpu7x:2x2x1
jax: 0.10.0
libtpu: 0.0.40
codegen_flags: <defaults>
</compile_context>

<pallas_src>
import math

import jax
import jax.numpy as jnp
from jax.experimental import pallas as pl
from jax.experimental.pallas import tpu as pltpu


def _diag_scale_kernel(x_ref, d_ref, b_ref, o_ref):
    """Elementwise: out = x * diag + bias (native input dtype)."""
    o_ref[...] = x_ref[...] * d_ref[...] + b_ref[...]


def linear_diagonal_weight(x, weight, bias, *, max_block_rows=2048):
    """x: (B, N), weight: (N, N), bias: (N,). Returns (B, N)."""
    B, in_size = x.shape
    out_size, w_in = weight.shape
    if not (out_size == w_in == in_size):
        raise ValueError(
            "Linear_diagonal_weight is only well-defined for square weight "
            f"(input_size == output_size); got weight {weight.shape}, x {x.shape}"
        )
    N = in_size
    dtype = x.dtype
    itemsize = jnp.dtype(dtype).itemsize

    diag = jnp.diagonal(weight).astype(dtype)   # (N,) — the whole "weight"
    bias_v = bias.astype(dtype)                 # (N,)

    # ---- Lane-dense view without HBM padding: fold k batch rows into the
    # lane dim so the feature width becomes a multiple of 128 when possible.
    # reshape (B, N) -> (B//k, k*N) is a pure layout view of the same
    # row-major HBM buffer; diag/bias are tiny, so tiling them is free.
    k = 128 // math.gcd(N, 128)
    if N % 128 != 0 and k > 1 and B % k == 0:
        Bv, Nv = B // k, k * N
        x_view = x.reshape(Bv, Nv)
        diag2d = jnp.tile(diag, k).reshape(1, Nv)
        bias2d = jnp.tile(bias_v, k).reshape(1, Nv)
    else:
        Bv, Nv = B, N
        x_view = x
        diag2d = diag.reshape(1, N)
        bias2d = bias_v.reshape(1, N)

    # ---- Feature tiling: lane-dense 128-multiple chunks when possible,
    # otherwise a single full-extent block (always legal; ragged lanes are
    # masked by Pallas — no padded slab, no post-slice).
    TN_TARGET = 4096
    tn = min(Nv, TN_TARGET) if Nv % 128 == 0 else Nv

    # ---- Batch tiling: size blocks against a VMEM budget that is safe on
    # v7x (64 MiB physical) and big enough on v5e/v6e to amortize the
    # ~0.35 us per-grid-step overhead.  Double-buffered x + out ≈ 4*tb*tn*B.
    VMEM_TILE_BUDGET = 32 * 1024 * 1024
    sub = 8 * max(1, 4 // itemsize)             # packed-sublane multiple (8/16/32)
    tb = VMEM_TILE_BUDGET // (4 * tn * itemsize)
    tb = max(sub, min(tb, max_block_rows))
    tb = (tb // sub) * sub
    if tb >= Bv:
        tb = Bv                                 # full-extent block: always legal

    # ---- Megacore (v7x has 2 TCs): if the batch grid has a single step,
    # split the feature dim so a second parallel axis exists.
    if pl.cdiv(Bv, tb) == 1 and tn == Nv and Nv % 128 == 0 and Nv >= 256:
        tn = max(128, ((Nv // 2) // 128) * 128)

    grid = (pl.cdiv(Bv, tb), pl.cdiv(Nv, tn))

    cost = pl.CostEstimate(
        flops=2 * B * N,
        transcendentals=0,
        bytes_accessed=2 * B * N * itemsize + 2 * N * itemsize,
    )

    out_view = pl.pallas_call(
        _diag_scale_kernel,
        out_shape=jax.ShapeDtypeStruct((Bv, Nv), dtype),
        grid=grid,
        in_specs=[
            pl.BlockSpec((tb, tn), lambda i, j: (i, j)),   # x tile
            pl.BlockSpec((1, tn), lambda i, j: (0, j)),    # diag (resident per j)
            pl.BlockSpec((1, tn), lambda i, j: (0, j)),    # bias (resident per j)
        ],
        out_specs=pl.BlockSpec((tb, tn), lambda i, j: (i, j)),
        compiler_params=pltpu.CompilerParams(
            dimension_semantics=("parallel", "parallel"),
            vmem_limit_bytes=48 * 1024 * 1024,
        ),
        cost_estimate=cost,
    )(x_view, diag2d, bias2d)

    return out_view.reshape(B, N)


if __name__ == "__main__":
    def ref_fn(x, w, b):
        mask = jnp.eye(w.shape[0], w.shape[1], dtype=w.dtype)
        return x @ (w * mask) + b

    # Module-implied small shape: input_size == output_size == 32, batch 8.
    B, N = 8, 32
    kx, kw, kb = jax.random.split(jax.random.PRNGKey(0), 3)
    x = jax.random.normal(kx, (B, N), dtype=jnp.float32)
    weight = jax.random.normal(kw, (N, N), dtype=jnp.float32) * 0.1
    bias = jax.random.normal(kb, (N,), dtype=jnp.float32) * 0.1

    out = jax.block_until_ready(linear_diagonal_weight(x, weight, bias))
    assert out.shape == (B, N)
    assert jnp.allclose(out, ref_fn(x, weight, bias), atol=1e-5, rtol=1e-5), \
        "mismatch vs reference (folded lane-dense path)"

    # Extra coverage: 128-multiple feature dim (2-D feature grid / megacore
    # split) and a non-foldable ragged feature dim (masked last-lane stores).
    for (B2, N2) in [(16, 256), (5, 48)]:
        kx, kw, kb = jax.random.split(jax.random.PRNGKey(B2 + N2), 3)
        x2 = jax.random.normal(kx, (B2, N2), dtype=jnp.float32)
        w2 = jax.random.normal(kw, (N2, N2), dtype=jnp.float32) * 0.1
        b2 = jax.random.normal(kb, (N2,), dtype=jnp.float32) * 0.1
        o2 = jax.block_until_ready(linear_diagonal_weight(x2, w2, b2))
        assert jnp.allclose(o2, ref_fn(x2, w2, b2), atol=1e-5, rtol=1e-5), \
            f"mismatch vs reference at shape ({B2}, {N2})"

    print("KERNEL_OK")
</pallas_src>

<mosaic_0001>
module attributes {stable_mosaic.version = 11 : i64} {
  func.func @_diag_scale_kernel(%arg0: i32, %arg1: i32, %arg2: memref<2x128xf32, #tpu.memory_space<vmem>>, %arg3: memref<1x128xf32, #tpu.memory_space<vmem>>, %arg4: memref<1x128xf32, #tpu.memory_space<vmem>>, %arg5: memref<2x128xf32, #tpu.memory_space<vmem>>) attributes {dimension_semantics = [#tpu.dimension_semantics<parallel>, #tpu.dimension_semantics<parallel>], iteration_bounds = array<i64: 1, 1>, scalar_prefetch = 0 : i64, scratch_operands = 0 : i64, tpu.core_type = #tpu.core_type<tc>, window_params = [{transform_indices = @transform_0, window_bounds = array<i64: 2, 128>}, {transform_indices = @transform_1, window_bounds = array<i64: 1, 128>}, {transform_indices = @transform_2, window_bounds = array<i64: 1, 128>}, {transform_indices = @transform_3, window_bounds = array<i64: 2, 128>}]} {
    %c0 = arith.constant 0 : index
    %c0_0 = arith.constant 0 : index
    %0 = vector.load %arg2[%c0, %c0_0] : memref<2x128xf32, #tpu.memory_space<vmem>>, vector<2x128xf32>
    %c0_1 = arith.constant 0 : index
    %c0_2 = arith.constant 0 : index
    %1 = vector.load %arg3[%c0_1, %c0_2] : memref<1x128xf32, #tpu.memory_space<vmem>>, vector<1x128xf32>
    %2 = vector.broadcast %1 : vector<1x128xf32> to vector<2x128xf32>
    %3 = arith.mulf %0, %2 : vector<2x128xf32>
    %c0_3 = arith.constant 0 : index
    %c0_4 = arith.constant 0 : index
    %4 = vector.load %arg4[%c0_3, %c0_4] : memref<1x128xf32, #tpu.memory_space<vmem>>, vector<1x128xf32>
    %5 = vector.broadcast %4 : vector<1x128xf32> to vector<2x128xf32>
    %6 = arith.addf %3, %5 : vector<2x128xf32>
    %c0_5 = arith.constant 0 : index
    %c0_6 = arith.constant 0 : index
    %7 = vector.load %arg5[%c0_5, %c0_6] : memref<2x128xf32, #tpu.memory_space<vmem>>, vector<2x128xf32>
    tpu.vector_store %arg5[%c0_5, %c0_6], %6 {strides = array<i32>} : memref<2x128xf32, #tpu.memory_space<vmem>>, vector<2x128xf32>,
    return
  }
  func.func @transform_0(%arg0: i32, %arg1: i32) -> (i32, i32) {
    %c0_i32 = arith.constant 0 : i32
    return %arg0, %arg1 : i32, i32
  }
  func.func @transform_1(%arg0: i32, %arg1: i32) -> (i32, i32) {
    %c0_i32 = arith.constant 0 : i32
    %c0_i32_0 = arith.constant 0 : i32
    return %c0_i32, %arg1 : i32, i32
  }
  func.func @transform_2(%arg0: i32, %arg1: i32) -> (i32, i32) {
    %c0_i32 = arith.constant 0 : i32
    %c0_i32_0 = arith.constant 0 : i32
    return %c0_i32, %arg1 : i32, i32
  }
  func.func @transform_3(%arg0: i32, %arg1: i32) -> (i32, i32) {
    %c0_i32 = arith.constant 0 : i32
    return %arg0, %arg1 : i32, i32
  }
}

</mosaic_0001>

<llo_original>
// kernel: tpu_custom_call.1
$region0: #{tpu_custom_call.1}
  #allocation0 [shape = 'u32[]', space=smem, size = 0x4, offset = 0x4, fixed_abs, tag = 'smem constant byte address 0x4 - core index']
  #allocation1 [shape = 'u32[144,128]{1,0:T(1,128)}', space=vmem, size = 0x12000, scoped, tag = 'internal scratch']
  %s0 = inlined_call_operand.hbm [shape: f32[2,128], index: 0, kind: input, shape index: {}]
  %s1 = inlined_call_operand.vmem [shape: f32[1,128], index: 1, kind: input, shape index: {}]
  %s2 = inlined_call_operand.vmem [shape: f32[1,128], index: 2, kind: input, shape index: {}]
  %s3 = inlined_call_operand.hbm [shape: f32[2,128], index: 3, kind: output, shape index: {}]
  %s4 = sld [smem:[#allocation0]]
  $region26: #{tpu_custom_call.1} parent=0
    _
  %s6 = ssub.s32 1, %s4
  %s7 = scalar_select 0, %s6, %s4
  $region1: #{tpu_custom_call.1} parent=0
    #allocation2 [shape = 'u8[1024]{0}', space=vmem, size = 0x400, scoped, tag = 'input window, operand 0, single buffered']
    #allocation3 [shape = 's32[1]{0}', space=sflag, size = 0x4, scoped, tag = 'scoped memory for tpu_custom_call.1']
    #allocation4 [shape = 's32[1]{0}', space=sflag, size = 0x4, scoped, tag = 'scoped memory for tpu_custom_call.1']
    #allocation5 [shape = 'u8[1024]{0}', space=vmem, size = 0x400, scoped, tag = 'output window, operand 0, single buffered']
    %8 = vsyncpa [#allocation3], 0
    %9 = vsyncpa [#allocation4], 0
    // Predicated region
    $region2: #{tpu_custom_call.1} parent=1 // pred_check
      _
    $region3: #{tpu_custom_call.1} parent=1 // pred_check_branch
      %11 = sbr.rel (0) target = $region5
    $region4: #{tpu_custom_call.1} parent=1 // pred_region
      %s13 = ssub.s32 32, 32
      %14 = vsyncadd [#allocation3], %s13
      %s16 = sshll.u32 [#allocation2], 4
      %s17 = int_to_ptr.vmem [resolvable:$true] %s16
      %19 = dma.hbm_to_vmem [thread:$0]  %s0, 32, %s17, [#allocation3]
    $region5: #{tpu_custom_call.1} parent=1 // pred_fallthru
      _
    // Predicated region
    $region6: #{tpu_custom_call.1} parent=1 // pred_check
      _
    $region7: #{tpu_custom_call.1} parent=1 // pred_check_branch
      %21 = sbr.rel (0) target = $region9
    $region8: #{tpu_custom_call.1} parent=1 // pred_region
      _
    $region9: #{tpu_custom_call.1} parent=1 // pred_fallthru
      _
    // Predicated region
    $region10: #{tpu_custom_call.1} parent=1 // pred_check
      _
    $region11: #{tpu_custom_call.1} parent=1 // pred_check_branch
      %23 = sbr.rel (0) target = $region13
    $region12: #{tpu_custom_call.1} parent=1 // pred_region
      _
    $region13: #{tpu_custom_call.1} parent=1 // pred_fallthru
      _
    // Predicated region
    $region14: #{tpu_custom_call.1} parent=1 // pred_check
      _
    $region15: #{tpu_custom_call.1} parent=1 // pred_check_branch
      %25 = sbr.rel (0) target = $region17
    $region16: #{tpu_custom_call.1} parent=1 // pred_region
      %26 = dma.done [#allocation3], 32
    $region17: #{tpu_custom_call.1} parent=1 // pred_fallthru
      _
    %v27 = vld [vmem:[#allocation2] sm:$0x3]
    %v28 = vld [vmem:[%s1] sm:$0x1]
    %v30 = vlaneseq
    %v31 = vshrl.u32 %v30, 7
    %v32 = vsub.s32 0, %v31
    %v33 = vrot.slane %v28, %v32
    %v35 = vmul.f32 %v27, %v33
    %v36 = vld [vmem:[%s2] sm:$0x1]
    %v38 = vlaneseq
    %v39 = vshrl.u32 %v38, 7
    %v40 = vsub.s32 0, %v39
    %v41 = vrot.slane %v36, %v40
    %v43 = vadd.f32 %v35, %v41
    %44 = vst [vmem:[#allocation5] sm:$0x3] %v43
    // Predicated region
    $region18: #{tpu_custom_call.1} parent=1 // pred_check
      _
    $region19: #{tpu_custom_call.1} parent=1 // pred_check_branch
      %46 = sbr.rel (0) target = $region21
    $region20: #{tpu_custom_call.1} parent=1 // pred_region
      %s48 = ssub.s32 32, 32
      %49 = vsyncadd [#allocation4], %s48
      %s51 = sshll.u32 [#allocation5], 4
      %s52 = int_to_ptr.vmem [resolvable:$true] %s51
      %54 = dma.vmem_to_hbm [thread:$0]  %s52, 32, %s3, [#allocation4]
    $region21: #{tpu_custom_call.1} parent=1 // pred_fallthru
      _
    // Predicated region
    $region22: #{tpu_custom_call.1} parent=1 // pred_check
      _
    $region23: #{tpu_custom_call.1} parent=1 // pred_check_branch
      %56 = sbr.rel (0) target = $region25
    $region24: #{tpu_custom_call.1} parent=1 // pred_region
      %57 = dma.done [#allocation4], 32
    $region25: #{tpu_custom_call.1} parent=1 // pred_fallthru
      _
    %58 = vsyncpa [#allocation3], 1
    %59 = vsyncpa [#allocation4], 1

</llo_original>
